<compile_context>
chip_gen: v5e
topology: v5e:2x2
jax: 0.10.0
libtpu: 0.0.40
codegen_flags: <defaults>
</compile_context>

<pallas_src>
import jax
import jax.numpy as jnp
from jax.experimental import pallas as pl
from jax.experimental.pallas import tpu as pltpu

_LANE = 1024          # lane-dense last dim (multiple of 128 -> unmasked vst)
_MAX_TILE_ROWS = 512  # (512, 1024) f32 tile = 2 MiB; double-buffered in+out = 8 MiB


def _logreg_kernel(x_ref, w_ref, b_ref, o_ref):
    # x_ref: (tile_rows, LANE) f32 in VMEM; w_ref/b_ref: (1,1) f32 in SMEM.
    w = w_ref[0, 0]
    b = b_ref[0, 0]
    # Elementwise: VPU mul/add, sigmoid's exp on the EUP slot (no MXU needed).
    o_ref[...] = jax.nn.sigmoid(x_ref[...] * w + b)


def _round_up(n, m):
    return ((n + m - 1) // m) * m


def logistic_regression_forward(x, weight, bias):
    """x: (N, 1) f32, weight: (1, 1) f32, bias: (1,) f32 -> (N, 1) f32."""
    n = x.shape[0]
    n_total = n * x.shape[1]  # in_features == 1

    # --- lane-dense repack: flatten and pad to a (rows, _LANE) slab ---
    x_flat = x.reshape(-1)
    padded = _round_up(max(n_total, 1), _LANE)
    rows = padded // _LANE
    tile_rows = min(_MAX_TILE_ROWS, rows)
    rows_padded = _round_up(rows, tile_rows)
    total_padded = rows_padded * _LANE
    if total_padded != n_total:
        x_flat = jnp.pad(x_flat, (0, total_padded - n_total))
    x2d = x_flat.reshape(rows_padded, _LANE)

    w2d = weight.reshape(1, 1).astype(jnp.float32)
    b2d = bias.reshape(1, 1).astype(jnp.float32)

    grid = (rows_padded // tile_rows,)

    out2d = pl.pallas_call(
        _logreg_kernel,
        out_shape=jax.ShapeDtypeStruct((rows_padded, _LANE), jnp.float32),
        grid=grid,
        in_specs=[
            # row-tiled, lane-dense input block (auto double-buffered pipeline)
            pl.BlockSpec((tile_rows, _LANE), lambda i: (i, 0)),
            # 1x1 weight / bias as SMEM scalars (no per-step VMEM DMA)
            pl.BlockSpec(memory_space=pltpu.MemorySpace.SMEM),
            pl.BlockSpec(memory_space=pltpu.MemorySpace.SMEM),
        ],
        out_specs=pl.BlockSpec((tile_rows, _LANE), lambda i: (i, 0)),
        compiler_params=pltpu.CompilerParams(
            dimension_semantics=("parallel",),  # independent tiles; v7x dual-TC
        ),
    )(x2d, w2d, b2d)

    # --- unpack: drop padding, restore (N, 1) ---
    return out2d.reshape(-1)[:n_total].reshape(n, 1)


if __name__ == "__main__":
    key = jax.random.PRNGKey(0)
    kx, kw, kb = jax.random.split(key, 3)

    # Deterministic "parameters" (nn.Linear(1,1) init range is U(-1, 1))
    weight = jax.random.uniform(kw, (1, 1), jnp.float32, minval=-1.0, maxval=1.0)
    bias = jax.random.uniform(kb, (1,), jnp.float32, minval=-1.0, maxval=1.0)

    # Small deterministic input batch, shape (N, 1)
    x = jax.random.normal(kx, (8, 1), jnp.float32)

    y = logistic_regression_forward(x, weight, bias)
    y = jax.block_until_ready(y)

    # Reference check in plain JAX
    y_ref = jax.nn.sigmoid(x @ weight.T + bias)
    assert y.shape == (8, 1)
    assert jnp.allclose(y, y_ref, atol=1e-6), "mismatch vs reference"

    print("KERNEL_OK")
</pallas_src>

<mosaic_0001>
module attributes {stable_mosaic.version = 11 : i64} {
  func.func @_logreg_kernel(%arg0: i32, %arg1: memref<1x1024xf32, #tpu.memory_space<vmem>>, %arg2: memref<1x1xf32, #tpu.memory_space<smem>>, %arg3: memref<1x1xf32, #tpu.memory_space<smem>>, %arg4: memref<1x1024xf32, #tpu.memory_space<vmem>>) attributes {dimension_semantics = [#tpu.dimension_semantics<parallel>], iteration_bounds = array<i64: 1>, scalar_prefetch = 0 : i64, scratch_operands = 0 : i64, tpu.core_type = #tpu.core_type<tc>, window_params = [{transform_indices = @transform_0, window_bounds = array<i64: 1, 1024>}, {transform_indices = @transform_1, window_bounds = array<i64: 1, 1>}, {transform_indices = @transform_2, window_bounds = array<i64: 1, 1>}, {transform_indices = @transform_3, window_bounds = array<i64: 1, 1024>}]} {
    %c0 = arith.constant 0 : index
    %c0_0 = arith.constant 0 : index
    %0 = memref.load %arg2[%c0, %c0_0] : memref<1x1xf32, #tpu.memory_space<smem>>
    %c0_1 = arith.constant 0 : index
    %c0_2 = arith.constant 0 : index
    %1 = memref.load %arg3[%c0_1, %c0_2] : memref<1x1xf32, #tpu.memory_space<smem>>
    %c0_3 = arith.constant 0 : index
    %c0_4 = arith.constant 0 : index
    %2 = vector.load %arg1[%c0_3, %c0_4] : memref<1x1024xf32, #tpu.memory_space<vmem>>, vector<1x1024xf32>
    %3 = vector.broadcast %0 : f32 to vector<1x1024xf32>
    %4 = arith.mulf %2, %3 : vector<1x1024xf32>
    %5 = vector.broadcast %1 : f32 to vector<1x1024xf32>
    %6 = arith.addf %4, %5 : vector<1x1024xf32>
    %7 = arith.negf %6 : vector<1x1024xf32>
    %8 = math.exp %7 : vector<1x1024xf32>
    %cst = arith.constant 1.000000e+00 : f32
    %9 = vector.broadcast %cst : f32 to vector<1x1024xf32>
    %10 = arith.addf %9, %8 : vector<1x1024xf32>
    %11 = arith.divf %9, %10 : vector<1x1024xf32>
    %c0_5 = arith.constant 0 : index
    %c0_6 = arith.constant 0 : index
    %12 = vector.load %arg4[%c0_5, %c0_6] : memref<1x1024xf32, #tpu.memory_space<vmem>>, vector<1x1024xf32>
    tpu.vector_store %arg4[%c0_5, %c0_6], %11 {strides = array<i32>} : memref<1x1024xf32, #tpu.memory_space<vmem>>, vector<1x1024xf32>,
    return
  }
  func.func @transform_0(%arg0: i32) -> (i32, i32) {
    %c0_i32 = arith.constant 0 : i32
    %c0_i32_0 = arith.constant 0 : i32
    return %arg0, %c0_i32 : i32, i32
  }
  func.func @transform_1(%arg0: i32) -> (i32, i32) {
    %c0_i32 = arith.constant 0 : i32
    %c0_i32_0 = arith.constant 0 : i32
    %c0_i32_1 = arith.constant 0 : i32
    return %c0_i32, %c0_i32_0 : i32, i32
  }
  func.func @transform_2(%arg0: i32) -> (i32, i32) {
    %c0_i32 = arith.constant 0 : i32
    %c0_i32_0 = arith.constant 0 : i32
    %c0_i32_1 = arith.constant 0 : i32
    return %c0_i32, %c0_i32_0 : i32, i32
  }
  func.func @transform_3(%arg0: i32) -> (i32, i32) {
    %c0_i32 = arith.constant 0 : i32
    %c0_i32_0 = arith.constant 0 : i32
    return %arg0, %c0_i32 : i32, i32
  }
}

</mosaic_0001>

<llo_original>
// kernel: tpu_custom_call.1
$region0: #{tpu_custom_call.1}
  #allocation0 [shape = 'u32[]', space=smem, size = 0x4, offset = 0x4, fixed_abs, tag = 'smem constant byte address 0x4 - core index']
  #allocation1 [shape = 'u32[72,128]{1,0:T(1,128)}', space=vmem, size = 0x9000, scoped, tag = 'internal scratch']
  #allocation2 [shape = 'f32[1,1]{1,0:T(1,128)S(6)}', space=smem, size = 0x200, scoped, tag = 'scoped memory for tpu_custom_call.1']
  #allocation3 [shape = 'f32[1,1]{1,0:T(1,128)S(6)}', space=smem, size = 0x200, scoped, tag = 'scoped memory for tpu_custom_call.1']
  %s0 = inlined_call_operand.hbm [shape: f32[1,1024], index: 0, kind: input, shape index: {}]
  %s1 = inlined_call_operand.<no memory space> [shape: f32[1,1], index: 1, kind: input, shape index: {}]
  %s2 = inlined_call_operand.<no memory space> [shape: f32[1,1], index: 2, kind: input, shape index: {}]
  %s3 = inlined_call_operand.hbm [shape: f32[1,1024], index: 3, kind: output, shape index: {}]
  %s4 = sld [smem:[#allocation0]]
  $region26: #{tpu_custom_call.1} parent=0
    _
  %s6 = ssub.s32 1, %s4
  %s7 = scalar_select 0, %s6, %s4
  %8 = sst [smem:[#allocation2]] %s1
  %9 = sst [smem:[#allocation3]] %s2
  $region1: #{tpu_custom_call.1} parent=0
    #allocation4 [shape = 'u8[4096]{0}', space=vmem, size = 0x1000, scoped, tag = 'input window, operand 0, single buffered']
    #allocation5 [shape = 's32[1]{0}', space=sflag, size = 0x4, scoped, tag = 'scoped memory for tpu_custom_call.1']
    #allocation6 [shape = 's32[1]{0}', space=sflag, size = 0x4, scoped, tag = 'scoped memory for tpu_custom_call.1']
    #allocation7 [shape = 'u8[4096]{0}', space=vmem, size = 0x1000, scoped, tag = 'output window, operand 0, single buffered']
    %10 = vsyncpa [#allocation5], 0
    %11 = vsyncpa [#allocation6], 0
    // Predicated region
    $region2: #{tpu_custom_call.1} parent=1 // pred_check
      _
    $region3: #{tpu_custom_call.1} parent=1 // pred_check_branch
      %13 = sbr.rel (0) target = $region5
    $region4: #{tpu_custom_call.1} parent=1 // pred_region
      %15 = vsyncadd [#allocation5], 0
      %s17 = sshll.u32 %s0, 4
      %s18 = int_to_ptr.hbm [resolvable:$true] %s17
      %s19 = sshll.u32 [#allocation4], 4
      %s20 = int_to_ptr.vmem [resolvable:$true] %s19
      %22 = dma.hbm_to_vmem [thread:$0]  %s18, 128, %s20, [#allocation5]
    $region5: #{tpu_custom_call.1} parent=1 // pred_fallthru
      _
    // Predicated region
    $region6: #{tpu_custom_call.1} parent=1 // pred_check
      _
    $region7: #{tpu_custom_call.1} parent=1 // pred_check_branch
      %24 = sbr.rel (0) target = $region9
    $region8: #{tpu_custom_call.1} parent=1 // pred_region
      _
    $region9: #{tpu_custom_call.1} parent=1 // pred_fallthru
      _
    // Predicated region
    $region10: #{tpu_custom_call.1} parent=1 // pred_check
      _
    $region11: #{tpu_custom_call.1} parent=1 // pred_check_branch
      %26 = sbr.rel (0) target = $region13
    $region12: #{tpu_custom_call.1} parent=1 // pred_region
      _
    $region13: #{tpu_custom_call.1} parent=1 // pred_fallthru
      _
    // Predicated region
    $region14: #{tpu_custom_call.1} parent=1 // pred_check
      _
    $region15: #{tpu_custom_call.1} parent=1 // pred_check_branch
      %28 = sbr.rel (0) target = $region17
    $region16: #{tpu_custom_call.1} parent=1 // pred_region
      %30 = dma.done [#allocation5], 128
    $region17: #{tpu_custom_call.1} parent=1 // pred_fallthru
      _
    %s31 = sld [smem:[#allocation2]]
    %s32 = sld [smem:[#allocation3]]
    %v33 = vld [vmem:[#allocation4] sm:$0xff]
    %v34 = vstv %s31
    %v35 = vmul.f32 %v33, %v34
    %v36 = vstv %s32
    %v37 = vadd.f32 %v35, %v36
    %v38 = vxor.u32 %v37, 2147483648
    %v39 = vmul.f32 %v38, 1.442695
    %v40 = vpow.pop %v39
    %v41 = vadd.f32 %v40, 1.0
    %v42 = vrcp.pop %v41
    %v43 = vmul.f32 %v41, %v42
    %v44 = vsub.f32 1.0, %v43
    %v45 = vmul.f32 %v42, %v44
    %v46 = vadd.f32 %v42, %v45
    %vm47 = vweird.f32 %v41
    %vm48 = vweird.f32 %v42
    %vm49 = vmor %vm47, %vm48
    %v50 = vsel %vm49, %v42, %v46
    %v51 = vand.u32 2147483647, %v41
    %vm52 = vcmp.eq.f32.partialorder %v51, 8.507059e+37
    %v53 = vand.u32 %v41, 2147483648
    %v54 = vor.u32 1.1754944e-38, %v53
    %v55 = vsel %vm52, %v54, %v50
    %v56 = vmul.f32 1.0, %v55
    %57 = vst [vmem:[#allocation7] sm:$0xff] %v56
    // Predicated region
    $region18: #{tpu_custom_call.1} parent=1 // pred_check
      _
    $region19: #{tpu_custom_call.1} parent=1 // pred_check_branch
      %59 = sbr.rel (0) target = $region21
    $region20: #{tpu_custom_call.1} parent=1 // pred_region
      %61 = vsyncadd [#allocation6], 0
      %s63 = sshll.u32 [#allocation7], 4
      %s64 = int_to_ptr.vmem [resolvable:$true] %s63
      %s65 = sshll.u32 %s3, 4
      %s66 = int_to_ptr.hbm [resolvable:$true] %s65
      %68 = dma.vmem_to_hbm [thread:$0]  %s64, 128, %s66, [#allocation6]
    $region21: #{tpu_custom_call.1} parent=1 // pred_fallthru
      _
    // Predicated region
    $region22: #{tpu_custom_call.1} parent=1 // pred_check
      _
    $region23: #{tpu_custom_call.1} parent=1 // pred_check_branch
      %70 = sbr.rel (0) target = $region25
    $region24: #{tpu_custom_call.1} parent=1 // pred_region
      %72 = dma.done [#allocation6], 128
    $region25: #{tpu_custom_call.1} parent=1 // pred_fallthru
      _
    %73 = vsyncpa [#allocation5], 1
    %74 = vsyncpa [#allocation6], 1

</llo_original>
